<compile_context>
chip_gen: v7x
topology: tpu7x:2x2x1
jax: 0.10.0
libtpu: 0.0.40
codegen_flags: <defaults>
</compile_context>

<pallas_src>
import functools

import jax
import jax.numpy as jnp
import numpy as np
from jax import lax
from jax.experimental import pallas as pl
from jax.experimental.pallas import tpu as pltpu


def _round_up(x, m):
    return ((x + m - 1) // m) * m


def _pick_tile_v(vp, want):
    """Largest multiple of 128 that is <= max(want, 128) and divides vp."""
    t = min(_round_up(max(want, 128), 128), vp)
    while vp % t:
        t -= 128
    return t


def _vmem_capacity_bytes():
    """Physical per-core VMEM; conservative 64 MiB (v7x) if the query fails."""
    try:
        return int(pltpu.get_tpu_info().vmem_capacity_bytes)
    except Exception:
        return 64 * 1024 * 1024


# --------------------------------------------------------------------------
# Kernels
# --------------------------------------------------------------------------

def _compute_h(enc_ref, dec_ref, w1e_ref, w1d_ref, b1_ref, h_ref, compute_dtype):
    """h = tanh([enc; dec] @ W1 + b1) for one (T-tile, U-tile), cached in VMEM.

    enc_ref: (1, tT, De)   dec_ref: (1, tU, Dd)
    w1e_ref: (De, H)       w1d_ref: (Dd, H)      b1_ref: (1, H) f32
    h_ref  : (tT*tU, H) scratch in compute_dtype
    """
    enc = enc_ref[0]                                                   # [tT, De]
    dec = dec_ref[0]                                                   # [tU, Dd]
    # Split-weight trick: concat([e, d]) @ W1 == e @ W1[:De] + d @ W1[De:].
    he = jnp.dot(enc, w1e_ref[...],
                 preferred_element_type=jnp.float32) + b1_ref[...]     # [tT, H]
    hd = jnp.dot(dec, w1d_ref[...],
                 preferred_element_type=jnp.float32)                   # [tU, H]
    # Broadcast add + tanh in compute_dtype (bf16 VPU/EUP path on v6e/v7x;
    # exact f32 when compute_dtype == f32).
    h = jnp.tanh(he.astype(compute_dtype)[:, None, :]
                 + hd.astype(compute_dtype)[None, :, :])               # [tT, tU, H]
    tT, tU, H = h.shape
    h_ref[...] = h.reshape(tT * tU, H).astype(h_ref.dtype)


def _jointnet_kernel_resident(enc_ref, dec_ref, w1e_ref, w1d_ref, b1_ref,
                              w2_ref, b2_ref, out_ref, h_ref,
                              *, tv, compute_dtype):
    """Grid step (b, T-tile, U-tile): w2/b2 fully VMEM-resident, V looped inside.

    w2_ref: (H, Vp)  b2_ref: (1, Vp)  out_ref: (1, tT, tU, Vp)
    """
    _compute_h(enc_ref, dec_ref, w1e_ref, w1d_ref, b1_ref, h_ref, compute_dtype)

    _, tT, tU, Vp = out_ref.shape
    n_v = Vp // tv

    def body(vi, carry):
        v0 = pl.multiple_of(vi * tv, tv)                              # 128-aligned
        out = jnp.dot(h_ref[...], w2_ref[:, pl.ds(v0, tv)],
                      preferred_element_type=jnp.float32)             # [tT*tU, tv]
        out = out + b2_ref[:, pl.ds(v0, tv)]
        out_ref[:, :, :, pl.ds(v0, tv)] = (
            out.reshape(1, tT, tU, tv).astype(out_ref.dtype))
        return carry

    lax.fori_loop(0, n_v, body, 0)


def _jointnet_kernel_tiled(enc_ref, dec_ref, w1e_ref, w1d_ref, b1_ref,
                           w2_ref, b2_ref, out_ref, h_ref, *, compute_dtype):
    """Grid step (b, T-tile, U-tile, V-tile): w2 streamed per V tile.

    NOTE: the V axis MUST remain the LAST grid axis and be "arbitrary" so that
    pl.when(vi == 0) fills h_ref before the other V tiles of the same
    (b, ti, ui) consume it. Do not reorder the grid or mark it parallel.
    """
    vi = pl.program_id(3)

    @pl.when(vi == 0)
    def _():
        _compute_h(enc_ref, dec_ref, w1e_ref, w1d_ref, b1_ref, h_ref,
                   compute_dtype)

    out = jnp.dot(h_ref[...], w2_ref[...],
                  preferred_element_type=jnp.float32) + b2_ref[...]    # [tT*tU, tV]
    _, tT, tU, tV = out_ref.shape
    out_ref[0] = out.reshape(tT, tU, tV).astype(out_ref.dtype)


# --------------------------------------------------------------------------
# Wrappers
# --------------------------------------------------------------------------

def jointnet_prepare_params(w1, b1, w2, b2, enc_dim, *,
                            compute_dtype=jnp.bfloat16):
    """One-time weight preprocessing (split / cast / pad); cache across calls."""
    Din, H = w1.shape
    Hw, V = w2.shape
    assert Hw == H, "w2 first dim must equal hidden size"
    De = enc_dim
    Dd = Din - De
    assert Dd > 0, "w1 first dim must exceed enc_dim"
    Vp = _round_up(V, 128)

    w1e = w1[:De, :].astype(compute_dtype)
    w1d = w1[De:, :].astype(compute_dtype)
    b1_2d = b1.reshape(1, H).astype(jnp.float32)
    w2c = w2.astype(compute_dtype)
    b2_2d = b2.reshape(1, V).astype(jnp.float32)
    if Vp != V:
        w2c = jnp.pad(w2c, ((0, 0), (0, Vp - V)))
        b2_2d = jnp.pad(b2_2d, ((0, 0), (0, Vp - V)))

    return dict(w1e=w1e, w1d=w1d, b1=b1_2d, w2=w2c, b2=b2_2d,
                De=De, Dd=Dd, H=H, V=V, Vp=Vp, compute_dtype=compute_dtype)


def jointnet_apply(params, enc, dec, *,
                   tile_t=64, tile_u=16, tile_v=512,
                   out_dtype=jnp.bfloat16, force_tiled_w2=False):
    """enc: [B, T, De], dec: [B, U, Dd] -> [B, T, U, V].

    Note: out_dtype defaults to bfloat16 (the projection is computed in
    compute_dtype regardless); pass out_dtype=jnp.float32 if callers need f32.
    """
    De, Dd, H = params["De"], params["Dd"], params["H"]
    V, Vp = params["V"], params["Vp"]
    cd = params["compute_dtype"]

    B, T, De_in = enc.shape
    Bd, U, Dd_in = dec.shape
    assert B == Bd, "batch mismatch between enc and dec"
    assert De_in == De and Dd_in == Dd, "feature dims do not match the weights"

    # T/U tiles 8-aligned (sublane); Tp/Up padded to tile multiples.
    tT = min(_round_up(tile_t, 8), _round_up(T, 8))
    tU = min(_round_up(tile_u, 8), _round_up(U, 8))
    Tp, Up = _round_up(T, tT), _round_up(U, tU)
    n_t, n_u = Tp // tT, Up // tU

    enc = enc.astype(cd)
    dec = dec.astype(cd)
    if Tp != T:
        enc = jnp.pad(enc, ((0, 0), (0, Tp - T), (0, 0)))
    if Up != U:
        dec = jnp.pad(dec, ((0, 0), (0, Up - U), (0, 0)))

    cd_b = jnp.dtype(cd).itemsize
    ob = jnp.dtype(out_dtype).itemsize

    # Per-generation scoped-VMEM budget (~3/4 of physical, <= 100 MiB):
    # ~48 MiB on v7x (64 MiB physical), ~96-100 MiB on v5e/v6e (128 MiB).
    budget = min((_vmem_capacity_bytes() * 3) // 4, 100 * 1024 * 1024)

    def vmem_est(w2_cols, out_cols):
        return (2 * (tT * De + tU * Dd) * cd_b            # enc/dec tiles (dbl-buf)
                + 2 * ((De + Dd) * H * cd_b + H * 4)       # w1e/w1d/b1 (dbl-buf)
                + 2 * (H * w2_cols * cd_b + w2_cols * 4)   # w2/b2
                + 2 * tT * tU * out_cols * ob              # output tile (dbl-buf)
                + tT * tU * H * cd_b                       # h scratch
                + tT * tU * H * (4 + cd_b))                # tanh intermediate

    resident_est = vmem_est(Vp, Vp)
    use_resident = (not force_tiled_w2) and (resident_est <= budget)

    # Advisory cost estimate so XLA schedules neighbors around the call.
    flops = (2 * B * Tp * Up * H * Vp
             + 2 * B * n_u * Tp * De * H
             + 2 * B * n_t * Up * Dd * H)
    transcendentals = B * Tp * Up * H
    w2_passes = 1 if use_resident else B * n_t * n_u
    bytes_accessed = (B * Tp * Up * Vp * ob
                      + B * (Tp * De + Up * Dd) * cd_b
                      + w2_passes * H * Vp * cd_b)
    cost = pl.CostEstimate(flops=int(flops),
                           transcendentals=int(transcendentals),
                           bytes_accessed=int(bytes_accessed))

    args = (enc, dec, params["w1e"], params["w1d"], params["b1"],
            params["w2"], params["b2"])

    if use_resident:
        tv = _pick_tile_v(Vp, tile_v)
        vmem_limit = int(min(budget, max(resident_est * 5 // 4, 32 * 1024 * 1024)))
        kernel = functools.partial(_jointnet_kernel_resident, tv=tv,
                                   compute_dtype=cd)
        out = pl.pallas_call(
            kernel,
            out_shape=jax.ShapeDtypeStruct((B, Tp, Up, Vp), out_dtype),
            grid_spec=pltpu.PrefetchScalarGridSpec(
                num_scalar_prefetch=0,
                grid=(B, n_t, n_u),
                in_specs=[
                    pl.BlockSpec((1, tT, De), lambda b, ti, ui: (b, ti, 0)),
                    pl.BlockSpec((1, tU, Dd), lambda b, ti, ui: (b, ui, 0)),
                    pl.BlockSpec((De, H), lambda b, ti, ui: (0, 0)),
                    pl.BlockSpec((Dd, H), lambda b, ti, ui: (0, 0)),
                    pl.BlockSpec((1, H), lambda b, ti, ui: (0, 0)),
                    pl.BlockSpec((H, Vp), lambda b, ti, ui: (0, 0)),   # resident
                    pl.BlockSpec((1, Vp), lambda b, ti, ui: (0, 0)),   # resident
                ],
                out_specs=pl.BlockSpec((1, tT, tU, Vp),
                                       lambda b, ti, ui: (b, ti, ui, 0)),
                scratch_shapes=[pltpu.VMEM((tT * tU, H), cd)],
            ),
            compiler_params=pltpu.CompilerParams(
                dimension_semantics=("parallel", "parallel", "parallel"),
                vmem_limit_bytes=vmem_limit,
            ),
            cost_estimate=cost,
        )(*args)
    else:
        tV = _pick_tile_v(Vp, tile_v)
        tiled_est = vmem_est(tV, tV)
        vmem_limit = int(min(budget, max(tiled_est * 5 // 4, 32 * 1024 * 1024)))
        kernel = functools.partial(_jointnet_kernel_tiled, compute_dtype=cd)
        out = pl.pallas_call(
            kernel,
            out_shape=jax.ShapeDtypeStruct((B, Tp, Up, Vp), out_dtype),
            grid_spec=pltpu.PrefetchScalarGridSpec(
                num_scalar_prefetch=0,
                grid=(B, n_t, n_u, Vp // tV),
                in_specs=[
                    pl.BlockSpec((1, tT, De), lambda b, ti, ui, vi: (b, ti, 0)),
                    pl.BlockSpec((1, tU, Dd), lambda b, ti, ui, vi: (b, ui, 0)),
                    pl.BlockSpec((De, H), lambda b, ti, ui, vi: (0, 0)),
                    pl.BlockSpec((Dd, H), lambda b, ti, ui, vi: (0, 0)),
                    pl.BlockSpec((1, H), lambda b, ti, ui, vi: (0, 0)),
                    pl.BlockSpec((H, tV), lambda b, ti, ui, vi: (0, vi)),
                    pl.BlockSpec((1, tV), lambda b, ti, ui, vi: (0, vi)),
                ],
                out_specs=pl.BlockSpec((1, tT, tU, tV),
                                       lambda b, ti, ui, vi: (b, ti, ui, vi)),
                scratch_shapes=[pltpu.VMEM((tT * tU, H), cd)],
            ),
            compiler_params=pltpu.CompilerParams(
                # V (h-cache reuse axis) must stay last + arbitrary.
                dimension_semantics=("parallel", "parallel", "parallel",
                                     "arbitrary"),
                vmem_limit_bytes=vmem_limit,
            ),
            cost_estimate=cost,
        )(*args)

    return out[:, :T, :U, :V]


def jointnet_forward(enc, dec, w1, b1, w2, b2, *,
                     compute_dtype=jnp.bfloat16, **kwargs):
    """Convenience wrapper: prepare weights + apply. For repeated calls, call
    jointnet_prepare_params once and reuse the params dict."""
    params = jointnet_prepare_params(w1, b1, w2, b2, enc.shape[-1],
                                     compute_dtype=compute_dtype)
    return jointnet_apply(params, enc, dec, **kwargs)


def jointnet_ref(enc, dec, w1, b1, w2, b2):
    """Pure-JAX reference mirroring the PyTorch forward exactly (f32)."""
    B, T, De = enc.shape
    _, U, Dd = dec.shape
    enc_b = jnp.broadcast_to(enc[:, :, None, :], (B, T, U, De))
    dec_b = jnp.broadcast_to(dec[:, None, :, :], (B, T, U, Dd))
    cat = jnp.concatenate([enc_b, dec_b], axis=-1)
    h = jnp.tanh(cat @ w1 + b1)
    return h @ w2 + b2


def _make_inputs(key, B, T, U, De, Dd, H, V):
    ks = jax.random.split(key, 6)
    enc = jax.random.normal(ks[0], (B, T, De), dtype=jnp.float32)
    dec = jax.random.normal(ks[1], (B, U, Dd), dtype=jnp.float32)
    w1 = jax.random.normal(ks[2], (De + Dd, H), dtype=jnp.float32) * 0.05
    b1 = jax.random.normal(ks[3], (H,), dtype=jnp.float32) * 0.05
    w2 = jax.random.normal(ks[4], (H, V), dtype=jnp.float32) * 0.05
    b2 = jax.random.normal(ks[5], (V,), dtype=jnp.float32) * 0.05
    return enc, dec, w1, b1, w2, b2


if __name__ == "__main__":
    # Case 1: tile-aligned shapes, f32 compute + f32 output (bit-faithful to the
    # reference), forcing the V-tiled kernel so the 4-D grid path is exercised.
    enc, dec, w1, b1, w2, b2 = _make_inputs(jax.random.PRNGKey(0),
                                            B=2, T=32, U=16, De=32, Dd=32,
                                            H=128, V=256)
    out = jax.block_until_ready(
        jointnet_forward(enc, dec, w1, b1, w2, b2,
                         tile_t=16, tile_u=8, tile_v=128,
                         compute_dtype=jnp.float32, out_dtype=jnp.float32,
                         force_tiled_w2=True))
    ref = jax.block_until_ready(jointnet_ref(enc, dec, w1, b1, w2, b2))
    np.testing.assert_allclose(np.asarray(out), np.asarray(ref),
                               rtol=1e-5, atol=1e-5)

    # Case 2: ragged T/U/V (padded in the wrapper), default bf16 compute/output,
    # resident-w2 fast path.
    enc, dec, w1, b1, w2, b2 = _make_inputs(jax.random.PRNGKey(1),
                                            B=2, T=19, U=9, De=32, Dd=32,
                                            H=128, V=200)
    out = jax.block_until_ready(jointnet_forward(enc, dec, w1, b1, w2, b2))
    ref = jax.block_until_ready(jointnet_ref(enc, dec, w1, b1, w2, b2))
    np.testing.assert_allclose(np.asarray(out, dtype=np.float32),
                               np.asarray(ref), rtol=3e-2, atol=3e-2)

    # Case 3: production-like feature dims (input 640 -> 512 hidden), small T/U,
    # resident w2 with multiple in-kernel V tiles, bf16 MXU path.
    enc, dec, w1, b1, w2, b2 = _make_inputs(jax.random.PRNGKey(2),
                                            B=1, T=24, U=8, De=320, Dd=320,
                                            H=512, V=1024)
    params = jointnet_prepare_params(w1, b1, w2, b2, enc_dim=320)
    out = jax.block_until_ready(
        jointnet_apply(params, enc, dec, tile_v=256))
    ref = jax.block_until_ready(jointnet_ref(enc, dec, w1, b1, w2, b2))
    np.testing.assert_allclose(np.asarray(out, dtype=np.float32),
                               np.asarray(ref), rtol=5e-2, atol=5e-2)

    print("KERNEL_OK")
</pallas_src>

<mosaic_0001>
module attributes {stable_mosaic.version = 11 : i64} {
  func.func @_jointnet_kernel_tiled(%arg0: i32, %arg1: i32, %arg2: i32, %arg3: i32, %arg4: memref<1x16x32xf32, #tpu.memory_space<vmem>>, %arg5: memref<1x8x32xf32, #tpu.memory_space<vmem>>, %arg6: memref<32x128xf32, #tpu.memory_space<vmem>>, %arg7: memref<32x128xf32, #tpu.memory_space<vmem>>, %arg8: memref<1x128xf32, #tpu.memory_space<vmem>>, %arg9: memref<128x128xf32, #tpu.memory_space<vmem>>, %arg10: memref<1x128xf32, #tpu.memory_space<vmem>>, %arg11: memref<1x16x8x128xf32, #tpu.memory_space<vmem>>, %arg12: memref<128x128xf32, #tpu.memory_space<vmem>>) attributes {dimension_semantics = [#tpu.dimension_semantics<parallel>, #tpu.dimension_semantics<parallel>, #tpu.dimension_semantics<parallel>, #tpu.dimension_semantics<arbitrary>], iteration_bounds = array<i64: 2, 2, 2, 2>, scalar_prefetch = 0 : i64, scratch_operands = 1 : i64, tpu.core_type = #tpu.core_type<tc>, window_params = [{transform_indices = @transform_0, window_bounds = array<i64: 1, 16, 32>}, {transform_indices = @transform_1, window_bounds = array<i64: 1, 8, 32>}, {pipeline_mode = #tpu.pipeline_mode<synchronous>, transform_indices = @transform_2, window_bounds = array<i64: 32, 128>}, {pipeline_mode = #tpu.pipeline_mode<synchronous>, transform_indices = @transform_3, window_bounds = array<i64: 32, 128>}, {pipeline_mode = #tpu.pipeline_mode<synchronous>, transform_indices = @transform_4, window_bounds = array<i64: 1, 128>}, {transform_indices = @transform_5, window_bounds = array<i64: 128, 128>}, {transform_indices = @transform_6, window_bounds = array<i64: 1, 128>}, {transform_indices = @transform_7, window_bounds = array<i64: 1, 16, 8, 128>}]} {
    %c0_i32 = arith.constant 0 : i32
    %0 = arith.cmpi eq, %arg3, %c0_i32 : i32
    %1 = arith.extui %0 : i1 to i32
    %c0_i32_0 = arith.constant 0 : i32
    %2 = arith.cmpi ne, %1, %c0_i32_0 : i32
    scf.if %2 {
      %c0_10 = arith.constant 0 : index
      %c0_11 = arith.constant 0 : index
      %c0_12 = arith.constant 0 : index
      %13 = vector.load %arg4[%c0_10, %c0_11, %c0_12] : memref<1x16x32xf32, #tpu.memory_space<vmem>>, vector<1x16x32xf32>
      %14 = vector.shape_cast %13 : vector<1x16x32xf32> to vector<16x32xf32>
      %c0_13 = arith.constant 0 : index
      %c0_14 = arith.constant 0 : index
      %c0_15 = arith.constant 0 : index
      %15 = vector.load %arg5[%c0_13, %c0_14, %c0_15] : memref<1x8x32xf32, #tpu.memory_space<vmem>>, vector<1x8x32xf32>
      %16 = vector.shape_cast %15 : vector<1x8x32xf32> to vector<8x32xf32>
      %c0_16 = arith.constant 0 : index
      %c0_17 = arith.constant 0 : index
      %17 = vector.load %arg6[%c0_16, %c0_17] : memref<32x128xf32, #tpu.memory_space<vmem>>, vector<32x128xf32>
      %cst_18 = arith.constant dense<0.000000e+00> : vector<16x128xf32>
      %18 = tpu.matmul %14, %17, %cst_18 {dimension_numbers = #tpu.dot_dimension_numbers<[1], [0], [0], [1], [0, 0, 1, 1], [], []>} : vector<16x32xf32>, vector<32x128xf32>, vector<16x128xf32> -> vector<16x128xf32>
      %c0_19 = arith.constant 0 : index
      %c0_20 = arith.constant 0 : index
      %19 = vector.load %arg8[%c0_19, %c0_20] : memref<1x128xf32, #tpu.memory_space<vmem>>, vector<1x128xf32>
      %20 = vector.broadcast %19 : vector<1x128xf32> to vector<16x128xf32>
      %21 = arith.addf %18, %20 : vector<16x128xf32>
      %c0_21 = arith.constant 0 : index
      %c0_22 = arith.constant 0 : index
      %22 = vector.load %arg7[%c0_21, %c0_22] : memref<32x128xf32, #tpu.memory_space<vmem>>, vector<32x128xf32>
      %cst_23 = arith.constant dense<0.000000e+00> : vector<8x128xf32>
      %23 = tpu.matmul %16, %22, %cst_23 {dimension_numbers = #tpu.dot_dimension_numbers<[1], [0], [0], [1], [0, 0, 1, 1], [], []>} : vector<8x32xf32>, vector<32x128xf32>, vector<8x128xf32> -> vector<8x128xf32>
      %24 = vector.shape_cast %21 : vector<16x128xf32> to vector<16x1x128xf32>
      %25 = vector.shape_cast %23 : vector<8x128xf32> to vector<1x8x128xf32>
      %26 = vector.broadcast %24 : vector<16x1x128xf32> to vector<16x8x128xf32>
      %27 = vector.broadcast %25 : vector<1x8x128xf32> to vector<16x8x128xf32>
      %28 = arith.addf %26, %27 : vector<16x8x128xf32>
      %29 = math.tanh %28 : vector<16x8x128xf32>
      %30 = vector.shape_cast %29 : vector<16x8x128xf32> to vector<128x128xf32>
      %c0_24 = arith.constant 0 : index
      %c0_25 = arith.constant 0 : index
      %31 = vector.load %arg12[%c0_24, %c0_25] : memref<128x128xf32, #tpu.memory_space<vmem>>, vector<128x128xf32>
      tpu.vector_store %arg12[%c0_24, %c0_25], %30 {strides = array<i32>} : memref<128x128xf32, #tpu.memory_space<vmem>>, vector<128x128xf32>,
    } else {
    }
    %c0 = arith.constant 0 : index
    %c0_1 = arith.constant 0 : index
    %3 = vector.load %arg12[%c0, %c0_1] : memref<128x128xf32, #tpu.memory_space<vmem>>, vector<128x128xf32>
    %c0_2 = arith.constant 0 : index
    %c0_3 = arith.constant 0 : index
    %4 = vector.load %arg9[%c0_2, %c0_3] : memref<128x128xf32, #tpu.memory_space<vmem>>, vector<128x128xf32>
    %cst = arith.constant dense<0.000000e+00> : vector<128x128xf32>
    %5 = tpu.matmul %3, %4, %cst {dimension_numbers = #tpu.dot_dimension_numbers<[1], [0], [0], [1], [0, 0, 1, 1], [], []>} : vector<128x128xf32>, vector<128x128xf32>, vector<128x128xf32> -> vector<128x128xf32>
    %c0_4 = arith.constant 0 : index
    %c0_5 = arith.constant 0 : index
    %6 = vector.load %arg10[%c0_4, %c0_5] : memref<1x128xf32, #tpu.memory_space<vmem>>, vector<1x128xf32>
    %7 = vector.broadcast %6 : vector<1x128xf32> to vector<128x128xf32>
    %8 = arith.addf %5, %7 : vector<128x128xf32>
    %9 = vector.shape_cast %8 : vector<128x128xf32> to vector<16x8x128xf32>
    %c0_6 = arith.constant 0 : index
    %c0_7 = arith.constant 0 : index
    %c0_8 = arith.constant 0 : index
    %c0_9 = arith.constant 0 : index
    %10 = vector.load %arg11[%c0_6, %c0_7, %c0_8, %c0_9] : memref<1x16x8x128xf32, #tpu.memory_space<vmem>>, vector<1x16x8x128xf32>
    %11 = vector.shape_cast %10 : vector<1x16x8x128xf32> to vector<16x8x128xf32>
    %12 = vector.shape_cast %9 : vector<16x8x128xf32> to vector<1x16x8x128xf32>
    tpu.vector_store %arg11[%c0_6, %c0_7, %c0_8, %c0_9], %12 {strides = array<i32>} : memref<1x16x8x128xf32, #tpu.memory_space<vmem>>, vector<1x16x8x128xf32>,
    return
  }
  func.func @transform_0(%arg0: i32, %arg1: i32, %arg2: i32, %arg3: i32) -> (i32, i32, i32) {
    %c0_i32 = arith.constant 0 : i32
    %c0_i32_0 = arith.constant 0 : i32
    return %arg0, %arg1, %c0_i32 : i32, i32, i32
  }
  func.func @transform_1(%arg0: i32, %arg1: i32, %arg2: i32, %arg3: i32) -> (i32, i32, i32) {
    %c0_i32 = arith.constant 0 : i32
    %c0_i32_0 = arith.constant 0 : i32
    return %arg0, %arg2, %c0_i32 : i32, i32, i32
  }
  func.func @transform_2(%arg0: i32, %arg1: i32, %arg2: i32, %arg3: i32) -> (i32, i32) {
    %c0_i32 = arith.constant 0 : i32
    %c0_i32_0 = arith.constant 0 : i32
    %c0_i32_1 = arith.constant 0 : i32
    return %c0_i32, %c0_i32_0 : i32, i32
  }
  func.func @transform_3(%arg0: i32, %arg1: i32, %arg2: i32, %arg3: i32) -> (i32, i32) {
    %c0_i32 = arith.constant 0 : i32
    %c0_i32_0 = arith.constant 0 : i32
    %c0_i32_1 = arith.constant 0 : i32
    return %c0_i32, %c0_i32_0 : i32, i32
  }
  func.func @transform_4(%arg0: i32, %arg1: i32, %arg2: i32, %arg3: i32) -> (i32, i32) {
    %c0_i32 = arith.constant 0 : i32
    %c0_i32_0 = arith.constant 0 : i32
    %c0_i32_1 = arith.constant 0 : i32
    return %c0_i32, %c0_i32_0 : i32, i32
  }
  func.func @transform_5(%arg0: i32, %arg1: i32, %arg2: i32, %arg3: i32) -> (i32, i32) {
    %c0_i32 = arith.constant 0 : i32
    %c0_i32_0 = arith.constant 0 : i32
    return %c0_i32, %arg3 : i32, i32
  }
  func.func @transform_6(%arg0: i32, %arg1: i32, %arg2: i32, %arg3: i32) -> (i32, i32) {
    %c0_i32 = arith.constant 0 : i32
    %c0_i32_0 = arith.constant 0 : i32
    return %c0_i32, %arg3 : i32, i32
  }
  func.func @transform_7(%arg0: i32, %arg1: i32, %arg2: i32, %arg3: i32) -> (i32, i32, i32, i32) {
    %c0_i32 = arith.constant 0 : i32
    return %arg0, %arg1, %arg2, %arg3 : i32, i32, i32, i32
  }
}

</mosaic_0001>

<llo_original>
// kernel: tpu_custom_call.1
$region0: #{tpu_custom_call.1}
  #allocation0 [shape = 'u32[]', space=smem, size = 0x4, offset = 0x4, fixed_abs, tag = 'smem constant byte address 0x4 - core index']
  #allocation1 [shape = 'u32[144,128]{1,0:T(1,128)}', space=vmem, size = 0x12000, scoped, tag = 'internal scratch']
  #allocation2 [shape = 'f32[128,128]{1,0:T(8,128)}', space=vmem, size = 0x10000, scoped, tag = 'scratch operand']
  %s0 = inlined_call_operand.hbm [shape: f32[2,32,32], index: 0, kind: input, shape index: {}]
  %s1 = inlined_call_operand.hbm [shape: f32[2,16,32], index: 1, kind: input, shape index: {}]
  %s2 = inlined_call_operand.hbm [shape: f32[32,128], index: 2, kind: input, shape index: {}]
  %s3 = inlined_call_operand.hbm [shape: f32[32,128], index: 3, kind: input, shape index: {}]
  %s4 = inlined_call_operand.vmem [shape: f32[1,128], index: 4, kind: input, shape index: {}]
  %s5 = inlined_call_operand.hbm [shape: f32[128,256], index: 5, kind: input, shape index: {}]
  %s6 = inlined_call_operand.vmem [shape: f32[1,256], index: 6, kind: input, shape index: {}]
  %s7 = inlined_call_operand.hbm [shape: f32[2,32,16,256], index: 7, kind: output, shape index: {}]
  %s8 = sld [smem:[#allocation0]]
  $region85: #{tpu_custom_call.1} parent=0
    _
  %s10 = ssub.s32 1, %s8
  %s11 = scalar_select 0, %s10, %s8
  $region1: #{tpu_custom_call.1} parent=0
    #allocation3 [shape = 'u8[16384]{0}', space=vmem, size = 0x4000, scoped, tag = 'input window, operand 0']
    #allocation4 [shape = 's32[2]{0}', space=sflag, size = 0x8, scoped, tag = 'scoped memory for tpu_custom_call.1']
    #allocation5 [shape = 's32[2]{0}', space=sflag, size = 0x8, scoped, tag = 'scoped memory for tpu_custom_call.1']
    #allocation6 [shape = 'u8[8192]{0}', space=vmem, size = 0x2000, scoped, tag = 'input window, operand 1']
    #allocation7 [shape = 's32[2]{0}', space=sflag, size = 0x8, scoped, tag = 'scoped memory for tpu_custom_call.1']
    #allocation8 [shape = 'u8[16384]{0}', space=vmem, size = 0x4000, scoped, tag = 'input window, operand 2, single buffered']
    #allocation9 [shape = 'u8[16384]{0}', space=vmem, size = 0x4000, scoped, tag = 'input window, operand 3, single buffered']
    #allocation10 [shape = 's32[1]{0}', space=sflag, size = 0x4, scoped, tag = 'scoped memory for tpu_custom_call.1']
    #allocation11 [shape = 'u8[131072]{0}', space=vmem, size = 0x20000, scoped, tag = 'input window, operand 5']
    #allocation12 [shape = 'u8[131072]{0}', space=vmem, size = 0x20000, scoped, tag = 'output window, operand 0']
    %12 = vsyncpa [#allocation4], 0
    %s13 = scalar_lea.sflag [#allocation4], 1
    %14 = vsyncpa %s13, 0
    %15 = vsyncpa [#allocation7], 0
    %s16 = scalar_lea.sflag [#allocation7], 1
    %17 = vsyncpa %s16, 0
    %18 = vsyncpa [#allocation10], 0
    %19 = vsyncpa [#allocation5], 0
    %s20 = scalar_lea.sflag [#allocation5], 1
    %21 = vsyncpa %s20, 0
    loop: start=0, step=1, limit=18
    $region2: #{tpu_custom_call.1} parent=1 // loop_pre_header
      _
    $region3: #{tpu_custom_call.1} parent=1 // loop_header
      %s23 = sphi 0, %s27
      %p24 = scmp.ge.s32.totalorder %s23, 18
      %s30 = sphi 0, %s56
      %s31 = sphi 0, %s52
      %s32 = sphi 0, %s48
      %s33 = sphi 0, %s44
      %s34 = sphi 0, %s30
      %s35 = sphi 0, %s31
      %s36 = sphi 0, %s32
      %s37 = sphi 0, %s33
      %s38 = sphi 0, %s34
      %s39 = sphi 0, %s35
      %s40 = sphi 0, %s36
      %s41 = sphi 0, %s37
      %s61 = sphi 0, %s63
      %s64 = sphi 0, %s61
      %s65 = sphi 0, %s64
      %s81 = sphi 0, %s65
      %s89 = sphi 0, %s91
      %s92 = sphi 0, %s89
      %s93 = sphi 0, %s92
      %s109 = sphi 0, %s93
      %s113 = sphi 0, %s113
      %s115 = sphi 0, %s113
      %s116 = sphi 0, %s115
      %s130 = sphi 0, %s116
      %s134 = sphi 0, %s134
      %s136 = sphi 0, %s134
      %s137 = sphi 0, %s136
      %s151 = sphi 0, %s137
      %s155 = sphi 0, %s155
      %s157 = sphi 0, %s155
      %s158 = sphi 0, %s157
      %s172 = sphi 0, %s158
      %s178 = sphi 0, %s180
      %s181 = sphi 0, %s178
      %s182 = sphi 0, %s181
      %s198 = sphi 0, %s182
      %s204 = sphi 0, %s206
      %s207 = sphi 0, %s204
      %s208 = sphi 0, %s207
      %s224 = sphi 0, %s208
      %s236 = sphi 0, %s238
      %s239 = sphi 0, %s236
      %s240 = sphi 0, %s239
      %s256 = sphi 0, %s240
    $region4: #{tpu_custom_call.1} parent=1 // loop_header_branch
      %26 = sbr.rel (%p24) target = $region8
    $region5: #{tpu_custom_call.1} parent=1 // loop_body
      %s28 = ssub.s32 %s23, 1
      %s29 = ssub.s32 %s23, 2
      %s42 = sadd.s32 1, %s33
      %p43 = scmp.ge.s32.totalorder %s42, 2
      %s44 = scalar_select %p43, 0, %s42
      %s45 = sadd.s32 1, %s32
      %s46 = scalar_select %p43, %s45, %s32
      %p47 = scmp.ge.s32.totalorder %s46, 2
      %s48 = scalar_select %p47, 0, %s46
      %s49 = sadd.s32 1, %s31
      %s50 = scalar_select %p47, %s49, %s31
      %p51 = scmp.ge.s32.totalorder %s50, 2
      %s52 = scalar_select %p51, 0, %s50
      %s53 = sadd.s32 1, %s30
      %s54 = scalar_select %p51, %s53, %s30
      %p55 = scmp.ge.s32.totalorder %s54, 2
      %s56 = scalar_select %p55, 0, %s54
      %s57 = ssub.s32 %s30, %s56
      %s58 = ssub.s32 %s31, %s52
      %s59 = sor.u32 %s57, %s58
      %p60 = scmp.eq.s32.totalorder %s59, 0
      %s62 = sadd.s32 %s61, 1
      %s63 = scalar_select %p60, %s61, %s62
      %p66 = pneg %p60
      %p67 = scmp.eq.s32.totalorder %s23, 15
      %p68 = por %p66, %p67
      %p69 = scmp.ne.s32.totalorder %s61, %s64
      %p70 = scmp.eq.s32.totalorder %s23, 0
      %p71 = por %p69, %p70
      %p72 = scmp.ne.s32.totalorder %s61, %s64
      %p73 = scmp.eq.s32.totalorder %s28, 15
      %p74 = por %p72, %p73
      %p75 = scmp.ne.s32.totalorder %s64, %s65
      %p76 = scmp.eq.s32.totalorder %s28, 0
      %p77 = por %p75, %p76
      %p78 = scmp.ne.s32.totalorder %s64, %s65
      %p79 = scmp.eq.s32.totalorder %s29, 15
      %p80 = por %p78, %p79
      %p82 = scmp.ne.s32.totalorder %s65, %s81
      %p83 = scmp.eq.s32.totalorder %s29, 0
      %p84 = por %p82, %p83
      %s85 = ssub.s32 %s30, %s56
      %s86 = ssub.s32 %s32, %s48
      %s87 = sor.u32 %s85, %s86
      %p88 = scmp.eq.s32.totalorder %s87, 0
      %s90 = sadd.s32 %s89, 1
      %s91 = scalar_select %p88, %s89, %s90
      %p94 = pneg %p88
      %p95 = scmp.eq.s32.totalorder %s23, 15
      %p96 = por %p94, %p95
      %p97 = scmp.ne.s32.totalorder %s89, %s92
      %p98 = scmp.eq.s32.totalorder %s23, 0
      %p99 = por %p97, %p98
      %p100 = scmp.ne.s32.totalorder %s89, %s92
      %p101 = scmp.eq.s32.totalorder %s28, 15
      %p102 = por %p100, %p101
      %p103 = scmp.ne.s32.totalorder %s92, %s93
      %p104 = scmp.eq.s32.totalorder %s28, 0
      %p105 = por %p103, %p104
      %p106 = scmp.ne.s32.totalorder %s92, %s93
      %p107 = scmp.eq.s32.totalorder %s29, 15
      %p108 = por %p106, %p107
      %p110 = scmp.ne.s32.totalorder %s93, %s109
      %p111 = scmp.eq.s32.totalorder %s29, 0
      %p112 = por %p110, %p111
      %s114 = sadd.s32 %s113, 1
      %p117 = scmp.eq.s32.totalorder %s23, 15
      %p118 = scmp.ne.s32.totalorder %s113, %s115
      %p119 = scmp.eq.s32.totalorder %s23, 0
      %p120 = por %p118, %p119
      %p121 = scmp.ne.s32.totalorder %s113, %s115
      %p122 = scmp.eq.s32.totalorder %s28, 15
      %p123 = por %p121, %p122
      %p124 = scmp.ne.s32.totalorder %s115, %s116
      %p125 = scmp.eq.s32.totalorder %s28, 0
      %p126 = por %p124, %p125
      %p127 = scmp.ne.s32.totalorder %s115, %s116
      %p128 = scmp.eq.s32.totalorder %s29, 15
      %p129 = por %p127, %p128
      %p131 = scmp.ne.s32.totalorder %s116, %s130
      %p132 = scmp.eq.s32.totalorder %s29, 0
      %p133 = por %p131, %p132
      %s135 = sadd.s32 %s134, 1
      %p138 = scmp.eq.s32.totalorder %s23, 15
      %p139 = scmp.ne.s32.totalorder %s134, %s136
      %p140 = scmp.eq.s32.totalorder %s23, 0
      %p141 = por %p139, %p140
      %p142 = scmp.ne.s32.totalorder %s134, %s136
      %p143 = scmp.eq.s32.totalorder %s28, 15
      %p144 = por %p142, %p143
      %p145 = scmp.ne.s32.totalorder %s136, %s137
      %p146 = scmp.eq.s32.totalorder %s28, 0
      %p147 = por %p145, %p146
      %p148 = scmp.ne.s32.totalorder %s136, %s137
      %p149 = scmp.eq.s32.totalorder %s29, 15
      %p150 = por %p148, %p149
      %p152 = scmp.ne.s32.totalorder %s137, %s151
      %p153 = scmp.eq.s32.totalorder %s29, 0
      %p154 = por %p152, %p153
      %s156 = sadd.s32 %s155, 1
      %p159 = scmp.eq.s32.totalorder %s23, 15
      %p160 = scmp.ne.s32.totalorder %s155, %s157
      %p161 = scmp.eq.s32.totalorder %s23, 0
      %p162 = por %p160, %p161
      %p163 = scmp.ne.s32.totalorder %s155, %s157
      %p164 = scmp.eq.s32.totalorder %s28, 15
      %p165 = por %p163, %p164
      %p166 = scmp.ne.s32.totalorder %s157, %s158
      %p167 = scmp.eq.s32.totalorder %s28, 0
      %p168 = por %p166, %p167
      %p169 = scmp.ne.s32.totalorder %s157, %s158
      %p170 = scmp.eq.s32.totalorder %s29, 15
      %p171 = por %p169, %p170
      %p173 = scmp.ne.s32.totalorder %s158, %s172
      %p174 = scmp.eq.s32.totalorder %s29, 0
      %p175 = por %p173, %p174
      %s176 = ssub.s32 %s33, %s44
      %p177 = scmp.eq.s32.totalorder %s176, 0
      %s179 = sadd.s32 %s178, 1
      %s180 = scalar_select %p177, %s178, %s179
      %p183 = pneg %p177
      %p184 = scmp.eq.s32.totalorder %s23, 15
      %p185 = por %p183, %p184
      %p186 = scmp.ne.s32.totalorder %s178, %s181
      %p187 = scmp.eq.s32.totalorder %s23, 0
      %p188 = por %p186, %p187
      %p189 = scmp.ne.s32.totalorder %s178, %s181
      %p190 = scmp.eq.s32.totalorder %s28, 15
      %p191 = por %p189, %p190
      %p192 = scmp.ne.s32.totalorder %s181, %s182
      %p193 = scmp.eq.s32.totalorder %s28, 0
      %p194 = por %p192, %p193
      %p195 = scmp.ne.s32.totalorder %s181, %s182
      %p196 = scmp.eq.s32.totalorder %s29, 15
      %p197 = por %p195, %p196
      %p199 = scmp.ne.s32.totalorder %s182, %s198
      %p200 = scmp.eq.s32.totalorder %s29, 0
      %p201 = por %p199, %p200
      %s202 = ssub.s32 %s33, %s44
      %p203 = scmp.eq.s32.totalorder %s202, 0
      %s205 = sadd.s32 %s204, 1
      %s206 = scalar_select %p203, %s204, %s205
      %p209 = pneg %p203
      %p210 = scmp.eq.s32.totalorder %s23, 15
      %p211 = por %p209, %p210
      %p212 = scmp.ne.s32.totalorder %s204, %s207
      %p213 = scmp.eq.s32.totalorder %s23, 0
      %p214 = por %p212, %p213
      %p215 = scmp.ne.s32.totalorder %s204, %s207
      %p216 = scmp.eq.s32.totalorder %s28, 15
      %p217 = por %p215, %p216
      %p218 = scmp.ne.s32.totalorder %s207, %s208
      %p219 = scmp.eq.s32.totalorder %s28, 0
      %p220 = por %p218, %p219
      %p221 = scmp.ne.s32.totalorder %s207, %s208
      %p222 = scmp.eq.s32.totalorder %s29, 15
      %p223 = por %p221, %p222
      %p225 = scmp.ne.s32.totalorder %s208, %s224
      %p226 = scmp.eq.s32.totalorder %s29, 0
      %p227 = por %p225, %p226
      %s228 = ssub.s32 %s30, %s56
      %s229 = ssub.s32 %s31, %s52
      %s230 = sor.u32 %s228, %s229
      %s231 = ssub.s32 %s32, %s48
      %s232 = sor.u32 %s230, %s231
      %s233 = ssub.s32 %s33, %s44
      %s234 = sor.u32 %s232, %s233
      %p235 = scmp.eq.s32.totalorder %s234, 0
      %s237 = sadd.s32 %s236, 1
      %s238 = scalar_select %p235, %s236, %s237
      %p241 = pneg %p235
      %p242 = scmp.eq.s32.totalorder %s23, 15
      %p243 = por %p241, %p242
      %p244 = scmp.ne.s32.totalorder %s236, %s239
      %p245 = scmp.eq.s32.totalorder %s23, 0
      %p246 = por %p244, %p245
      %p247 = scmp.ne.s32.totalorder %s236, %s239
      %p248 = scmp.eq.s32.totalorder %s28, 15
      %p249 = por %p247, %p248
      %p250 = scmp.ne.s32.totalorder %s239, %s240
      %p251 = scmp.eq.s32.totalorder %s28, 0
      %p252 = por %p250, %p251
      %p253 = scmp.ne.s32.totalorder %s239, %s240
      %p254 = scmp.eq.s32.totalorder %s29, 15
      %p255 = por %p253, %p254
      %p257 = scmp.ne.s32.totalorder %s240, %s256
      %p258 = scmp.eq.s32.totalorder %s29, 0
      %p259 = por %p257, %p258
      %p260 = scmp.le.s32.totalorder 1, %s23
      %p261 = scmp.lt.s32.totalorder %s23, 17
      %p262 = pnand %p260, %p261
      %p263 = pneg %p262
      // Predicated region
      $region9: #{tpu_custom_call.1} parent=5 // pred_check
        _
      $region10: #{tpu_custom_call.1} parent=5 // pred_check_branch
        %265 = sbr.rel (%p262) target = $region12
      $region11: #{tpu_custom_call.1} parent=5 // pred_region
        %s266 = ssub.s32 %s23, 1
        // Predicated region
        $region13: #{tpu_custom_call.1} parent=11 // pred_check
          %p267 = pneg %p126
        $region14: #{tpu_custom_call.1} parent=11 // pred_check_branch
          %269 = sbr.rel (%p267) target = $region16
        $region15: #{tpu_custom_call.1} parent=11 // pred_region
          %s271 = ssub.s32 512, 512
          %272 = vsyncadd [#allocation7], %s271
          %s273 = sshll.u32 [#allocation8], 4
          %s274 = int_to_ptr.vmem [resolvable:$true] %s273
          %279 = dma.hbm_to_vmem [thread:$0]  %s2, 512, %s274, [#allocation7], 128, 128, 8
        $region16: #{tpu_custom_call.1} parent=11 // pred_fallthru
          _
        // Predicated region
        $region17: #{tpu_custom_call.1} parent=11 // pred_check
          %p280 = pneg %p147
        $region18: #{tpu_custom_call.1} parent=11 // pred_check_branch
          %282 = sbr.rel (%p280) target = $region20
        $region19: #{tpu_custom_call.1} parent=11 // pred_region
          %s284 = ssub.s32 512, 512
          %285 = vsyncadd [#allocation10], %s284
          %s286 = sshll.u32 [#allocation9], 4
          %s287 = int_to_ptr.vmem [resolvable:$true] %s286
          %292 = dma.hbm_to_vmem [thread:$0]  %s3, 512, %s287, [#allocation10], 128, 128, 8
        $region20: #{tpu_custom_call.1} parent=11 // pred_fallthru
          _
        // Predicated region
        $region21: #{tpu_custom_call.1} parent=11 // pred_check
          %p293 = pneg %p168
        $region22: #{tpu_custom_call.1} parent=11 // pred_check_branch
          %295 = sbr.rel (%p293) target = $region24
        $region23: #{tpu_custom_call.1} parent=11 // pred_region
          _
        $region24: #{tpu_custom_call.1} parent=11 // pred_fallthru
          _
      $region12: #{tpu_custom_call.1} parent=5 // pred_fallthru
        _
      %p296 = scmp.lt.s32.totalorder %s23, 16
      // Predicated region
      $region25: #{tpu_custom_call.1} parent=5 // pred_check
        %p297 = pneg %p296
      $region26: #{tpu_custom_call.1} parent=5 // pred_check_branch
        %299 = sbr.rel (%p297) target = $region28
      $region27: #{tpu_custom_call.1} parent=5 // pred_region
        // Predicated region
        $region29: #{tpu_custom_call.1} parent=27 // pred_check
          %p300 = pneg %p71
        $region30: #{tpu_custom_call.1} parent=27 // pred_check_branch
          %302 = sbr.rel (%p300) target = $region32
        $region31: #{tpu_custom_call.1} parent=27 // pred_region
          %s303 = sand.u32 %s23, 1
          %s304 = scalar_lea.sflag [#allocation4], %s303
          %s305 = sand.u32 %s61, 1
          %s306 = smul.addr %s305, 16
          %s307 = scalar_lea.vmem [#allocation3], %s306
          %s308 = smul.u32 2, %s31
          %s310 = ssub.s32 256, 256
          %311 = vsyncadd %s304, %s310
          %s312 = smul.addr %s30, 4
          %s313 = sadd.s32 %s308, %s312
          %s314 = smul.addr %s313, 128
          %s315 = scalar_lea.hbm %s0, %s314
          %s316 = sshll.u32 %s307, 4
          %s317 = int_to_ptr.vmem [resolvable:$true] %s316
          %322 = dma.hbm_to_vmem [thread:$0]  %s315, 256, %s317, %s304, 128, 128, 8
        $region32: #{tpu_custom_call.1} parent=27 // pred_fallthru
          _
        // Predicated region
        $region33: #{tpu_custom_call.1} parent=27 // pred_check
          %p323 = pneg %p99
        $region34: #{tpu_custom_call.1} parent=27 // pred_check_branch
          %325 = sbr.rel (%p323) target = $region36
        $region35: #{tpu_custom_call.1} parent=27 // pred_region
          %s326 = sand.u32 %s23, 1
          %s327 = scalar_lea.sflag [#allocation7], %s326
          %s328 = sand.u32 %s89, 1
          %s329 = smul.addr %s328, 8
          %s330 = scalar_lea.vmem [#allocation6], %s329
          %s332 = ssub.s32 128, 128
          %333 = vsyncadd %s327, %s332
          %s334 = smul.addr %s30, 2
          %s335 = sadd.s32 %s32, %s334
          %s336 = smul.addr %s335, 128
          %s337 = scalar_lea.hbm %s1, %s336
          %s339 = sshll.u32 %s330, 4
          %s340 = int_to_ptr.vmem [resolvable:$true] %s339
          %342 = dma.hbm_to_vmem [thread:$0]  %s337, 128, %s340, %s327
        $region36: #{tpu_custom_call.1} parent=27 // pred_fallthru
          _
        // Predicated region
        $region37: #{tpu_custom_call.1} parent=27 // pred_check
          %p343 = pneg %p188
        $region38: #{tpu_custom_call.1} parent=27 // pred_check_branch
          %345 = sbr.rel (%p343) target = $region40
        $region39: #{tpu_custom_call.1} parent=27 // pred_region
          %s346 = sand.u32 %s23, 1
          %s347 = scalar_lea.sflag [#allocation4], %s346
          %s348 = sand.u32 %s178, 1
          %s349 = smul.addr %s348, 128
          %s350 = scalar_lea.vmem [#allocation11], %s349
          %s352 = ssub.s32 2048, 2048
          %353 = vsyncadd %s347, %s352
          %s354 = smul.addr %s33, 128
          %s355 = scalar_lea.hbm %s5, %s354
          %s356 = sshll.u32 %s350, 4
          %s357 = int_to_ptr.vmem [resolvable:$true] %s356
          %362 = dma.hbm_to_vmem [thread:$0]  %s355, 2048, %s357, %s347, 256, 128, 8
        $region40: #{tpu_custom_call.1} parent=27 // pred_fallthru
          _
        // Predicated region
        $region41: #{tpu_custom_call.1} parent=27 // pred_check
          %p363 = pneg %p214
        $region42: #{tpu_custom_call.1} parent=27 // pred_check_branch
          %365 = sbr.rel (%p363) target = $region44
        $region43: #{tpu_custom_call.1} parent=27 // pred_region
          %p366 = scmp.lt.s32.totalorder %s33, 1
          %s367 = scalar_select %p366, %s33, 1
          %s368 = scalar_lea.vmem %s6, %s367
        $region44: #{tpu_custom_call.1} parent=27 // pred_fallthru
          _
      $region28: #{tpu_custom_call.1} parent=5 // pred_fallthru
        _
      %p369 = scmp.le.s32.totalorder 1, %s23
      %p370 = scmp.lt.s32.totalorder %s23, 17
      %p371 = pnand %p369, %p370
      %p372 = pneg %p371
      // Predicated region
      $region45: #{tpu_custom_call.1} parent=5 // pred_check
        _
      $region46: #{tpu_custom_call.1} parent=5 // pred_check_branch
        %374 = sbr.rel (%p371) target = $region48
      $region47: #{tpu_custom_call.1} parent=5 // pred_region
        %s375 = ssub.s32 %s23, 1
        %s376 = sand.u32 %s28, 1
        %s377 = scalar_lea.sflag [#allocation4], %s376
        %s378 = sand.u32 %s64, 1
        %s379 = smul.addr %s378, 16
        %s380 = scalar_lea.vmem [#allocation3], %s379
        // Predicated region
        $region49: #{tpu_custom_call.1} parent=47 // pred_check
          %p381 = pneg %p77
        $region50: #{tpu_custom_call.1} parent=47 // pred_check_branch
          %383 = sbr.rel (%p381) target = $region52
        $region51: #{tpu_custom_call.1} parent=47 // pred_region
          %384 = dma.done %s377, 256
        $region52: #{tpu_custom_call.1} parent=47 // pred_fallthru
          _
        %s385 = sand.u32 %s28, 1
        %s386 = scalar_lea.sflag [#allocation7], %s385
        %s387 = sand.u32 %s92, 1
        %s388 = smul.addr %s387, 8
        %s389 = scalar_lea.vmem [#allocation6], %s388
        // Predicated region
        $region53: #{tpu_custom_call.1} parent=47 // pred_check
          %p390 = pneg %p105
        $region54: #{tpu_custom_call.1} parent=47 // pred_check_branch
          %392 = sbr.rel (%p390) target = $region56
        $region55: #{tpu_custom_call.1} parent=47 // pred_region
          %393 = dma.done %s386, 128
        $region56: #{tpu_custom_call.1} parent=47 // pred_fallthru
          _
        // Predicated region
        $region57: #{tpu_custom_call.1} parent=47 // pred_check
          %p394 = pneg %p126
        $region58: #{tpu_custom_call.1} parent=47 // pred_check_branch
          %396 = sbr.rel (%p394) target = $region60
        $region59: #{tpu_custom_call.1} parent=47 // pred_region
          %397 = dma.done [#allocation7], 512
        $region60: #{tpu_custom_call.1} parent=47 // pred_fallthru
          _
        // Predicated region
        $region61: #{tpu_custom_call.1} parent=47 // pred_check
          %p398 = pneg %p147
        $region62: #{tpu_custom_call.1} parent=47 // pred_check_branch
          %400 = sbr.rel (%p398) target = $region64
        $region63: #{tpu_custom_call.1} parent=47 // pred_region
          %401 = dma.done [#allocation10], 512
        $region64: #{tpu_custom_call.1} parent=47 // pred_fallthru
          _
        %s402 = sand.u32 %s28, 1
        %s403 = scalar_lea.sflag [#allocation4], %s402
        %s404 = sand.u32 %s181, 1
        %s405 = smul.addr %s404, 128
        %s406 = scalar_lea.vmem [#allocation11], %s405
        // Predicated region
        $region65: #{tpu_custom_call.1} parent=47 // pred_check
          %p407 = pneg %p194
        $region66: #{tpu_custom_call.1} parent=47 // pred_check_branch
          %409 = sbr.rel (%p407) target = $region68
        $region67: #{tpu_custom_call.1} parent=47 // pred_region
          %410 = dma.done %s403, 2048
        $region68: #{tpu_custom_call.1} parent=47 // pred_fallthru
          _
        %s411 = sand.u32 %s28, 1
        %s412 = scalar_lea.sflag [#allocation4], %s411
        %s413 = sand.u32 %s64, 1
        %s414 = smul.addr %s413, 16
        %s415 = scalar_lea.vmem [#allocation3], %s414
        %p416 = pneg %p77
        %p417 = pneg %p74
        %s418 = sand.u32 %s28, 1
        %s419 = scalar_lea.sflag [#allocation7], %s418
        %s420 = sand.u32 %s92, 1
        %s421 = smul.addr %s420, 8
        %s422 = scalar_lea.vmem [#allocation6], %s421
        %p423 = pneg %p105
        %p424 = pneg %p102
        %p425 = pneg %p126
        %p426 = pneg %p123
        %p427 = pneg %p147
        %p428 = pneg %p144
        %p429 = pneg %p168
        %p430 = pneg %p165
        %s431 = sand.u32 %s28, 1
        %s432 = scalar_lea.sflag [#allocation4], %s431
        %s433 = sand.u32 %s181, 1
        %s434 = smul.addr %s433, 128
        %s435 = scalar_lea.vmem [#allocation11], %s434
        %p436 = pneg %p194
        %p437 = pneg %p191
        %p438 = scmp.lt.s32.totalorder %s37, 1
        %s439 = scalar_select %p438, %s37, 1
        %s440 = scalar_lea.vmem %s6, %s439
        %p441 = pneg %p220
        %p442 = pneg %p217
        %p443 = pneg %p252
        %p444 = pneg %p249
        %s445 = sand.u32 %s239, 1
        %s446 = scalar_lea.sflag [#allocation5], %s445
        %s447 = sand.u32 %s239, 1
        %s448 = smul.addr %s447, 128
        %s449 = scalar_lea.vmem [#allocation12], %s448
        %s450 = smul.u32 2, %s35
        %p451 = scmp.lt.s32.totalorder %s37, 1
        %s452 = scalar_select %p451, %s37, 1
        %s453 = scalar_lea.vmem %s6, %s452
        %s454 = smul.u32 16, %s35
        %p455 = scmp.eq.s32.totalorder %s37, 0
        // Predicated region
        $region69: #{tpu_custom_call.1} parent=47 // pred_check
          %p456 = pneg %p455
        $region70: #{tpu_custom_call.1} parent=47 // pred_check_branch
          %458 = sbr.rel (%p456) target = $region72
        $region71: #{tpu_custom_call.1} parent=47 // pred_region
          %v459 = vld [vmem:[%s380] sm:$0xff]
          %v460 = vld [vmem:[%s380 + $0x8] sm:$0xff]
          %v461 = vld [vmem:[%s389] sm:$0xff]
          %v462 = vld [vmem:[#allocation8] sm:$0xff]
          %v463 = vld [vmem:[#allocation8 + $0x8] sm:$0xff]
          %v464 = vld [vmem:[#allocation8 + $0x10] sm:$0xff]
          %v465 = vld [vmem:[#allocation8 + $0x18] sm:$0xff]
          %v466 = vld [vmem:[%s4] sm:$0x1]
          %v468 = vlaneseq
          %v469 = vshrl.u32 %v468, 7
          %v470 = vsub.s32 0, %v469
          %v471 = vrot.slane %v466, %v470
          %vm473 = vcmask 261120
          %v475 = vsel %vm473, %v459, 0
          %v478 = vsel %vm473, %v460, 0
          %480 = vmatprep.subr.mxu0 0.0
          %481 = vmatpush1.msra.mxu0 %v462
          %482 = vmatprep.subr.mxu0 0.0
          %483 = vmatpush1.msra.mxu0 %v463
          %484 = vmatprep.subr.mxu0 0.0
          %485 = vmatpush1.msra.mxu0 %v464
          %486 = vmatprep.subr.mxu0 0.0
          %487 = vmatpush1.msra.mxu0 %v465
          %488 = vmatprep.subr.mxu0 0.0
          %489 = vmatpush1.msra.mxu0 0.0
          %490 = vmatprep.subr.mxu0 0.0
          %491 = vmatpush1.msra.mxu0 0.0
          %492 = vmatprep.subr.mxu0 0.0
          %493 = vmatpush1.msra.mxu0 0.0
          %494 = vmatprep.subr.mxu0 0.0
          %495 = vmatpush1.msra.mxu0 0.0
          %496 = vmatprep.subr.mxu0 0.0
          %497 = vmatpush1.msra.mxu0 0.0
          %498 = vmatprep.subr.mxu0 0.0
          %499 = vmatpush1.msra.mxu0 0.0
          %500 = vmatprep.subr.mxu0 0.0
          %501 = vmatpush1.msra.mxu0 0.0
          %502 = vmatprep.subr.mxu0 0.0
          %503 = vmatpush1.msra.mxu0 0.0
          %504 = vmatprep.subr.mxu0 0.0
          %505 = vmatpush1.msra.mxu0 0.0
          %506 = vmatprep.subr.mxu0 0.0
          %507 = vmatpush1.msra.mxu0 0.0
          %508 = vmatprep.subr.mxu0 0.0
          %509 = vmatpush1.msra.mxu0 0.0
          %510 = vmatprep.subr.mxu0 0.0
          %511 = vmatpush1.msra.mxu0 0.0
          %512 = vmatprep.subr.mxu0 0.0
          %513 = vmatpush1.msra.mxu0 0.0
          %514 = vmatprep.subr.mxu0 0.0
          %515 = vmatpush1.msra.mxu0 0.0
          %516 = vmatprep.subr.mxu0 0.0
          %517 = vmatpush1.msra.mxu0 0.0
          %518 = vmatprep.subr.mxu0 0.0
          %519 = vmatpush1.msra.mxu0 0.0
          %520 = vmatprep.subr.mxu0 0.0
          %521 = vmatpush1.msra.mxu0 0.0
          %522 = vmatprep.subr.mxu0 0.0
          %523 = vmatpush1.msra.mxu0 0.0
          %524 = vmatprep.subr.mxu0 0.0
          %525 = vmatpush1.msra.mxu0 0.0
          %526 = vmatprep.subr.mxu0 0.0
          %527 = vmatpush1.msra.mxu0 0.0
          %528 = vmatprep.subr.mxu0 0.0
          %529 = vmatpush1.msra.mxu0 0.0
          %530 = vmatprep.subr.mxu0 0.0
          %531 = vmatpush1.msra.mxu0 0.0
          %532 = vmatprep.subr.mxu0 0.0
          %533 = vmatpush1.msra.mxu0 0.0
          %534 = vmatprep.subr.mxu0 0.0
          %535 = vmatpush1.msra.mxu0 0.0
          %536 = vmatprep.subr.mxu0 0.0
          %537 = vmatpush1.msra.mxu0 0.0
          %538 = vmatprep.subr.mxu0 0.0
          %539 = vmatpush1.msra.mxu0 0.0
          %540 = vmatprep.subr.mxu0 0.0
          %541 = vmatpush1.msra.mxu0 0.0
          %542 = vmatprep.subr.mxu0 0.0
          %543 = vmatpush1.msra.mxu0 0.0
          %544 = vmatprep.mubr.f32.mxu0 0.0
          %545 = vmatmul.mubr.f32.gmra.mrb[0].mxu0 %v475
          %v546 = vpop.f32.mrb[0].mxu0
          %v547 = vadd.f32 %v471, %v546
          %v548 = vpop.f32.mrb[0].mxu0
          %549 = vmatprep.mubr.f32.mxu0 0.0
          %550 = vmatmul.mubr.f32.gmra.mrb[0].mxu0 %v478
          %v551 = vpop.f32.mrb[0].mxu0
          %v552 = vadd.f32 %v471, %v551
          %v553 = vpop.f32.mrb[0].mxu0
          %554 = vdwg.mxu0
          %v555 = vld [vmem:[#allocation9] sm:$0xff]
          %v556 = vld [vmem:[#allocation9 + $0x8] sm:$0xff]
          %v557 = vld [vmem:[#allocation9 + $0x10] sm:$0xff]
          %v558 = vld [vmem:[#allocation9 + $0x18] sm:$0xff]
          %v560 = vsel %vm473, %v461, 0
          %562 = vmatprep.subr.mxu0 0.0
          %563 = vmatpush1.msra.mxu0 %v555
          %564 = vmatprep.subr.mxu0 0.0
          %565 = vmatpush1.msra.mxu0 %v556
          %566 = vmatprep.subr.mxu0 0.0
          %567 = vmatpush1.msra.mxu0 %v557
          %568 = vmatprep.subr.mxu0 0.0
          %569 = vmatpush1.msra.mxu0 %v558
          %570 = vmatprep.subr.mxu0 0.0
          %571 = vmatpush1.msra.mxu0 0.0
          %572 = vmatprep.subr.mxu0 0.0
          %573 = vmatpush1.msra.mxu0 0.0
          %574 = vmatprep.subr.mxu0 0.0
          %575 = vmatpush1.msra.mxu0 0.0
          %576 = vmatprep.subr.mxu0 0.0
          %577 = vmatpush1.msra.mxu0 0.0
          %578 = vmatprep.subr.mxu0 0.0
          %579 = vmatpush1.msra.mxu0 0.0
          %580 = vmatprep.subr.mxu0 0.0
          %581 = vmatpush1.msra.mxu0 0.0
          %582 = vmatprep.subr.mxu0 0.0
          %583 = vmatpush1.msra.mxu0 0.0
          %584 = vmatprep.subr.mxu0 0.0
          %585 = vmatpush1.msra.mxu0 0.0
          %586 = vmatprep.subr.mxu0 0.0
          %587 = vmatpush1.msra.mxu0 0.0
          %588 = vmatprep.subr.mxu0 0.0
          %589 = vmatpush1.msra.mxu0 0.0
          %590 = vmatprep.subr.mxu0 0.0
          %591 = vmatpush1.msra.mxu0 0.0
          %592 = vmatprep.subr.mxu0 0.0
          %593 = vmatpush1.msra.mxu0 0.0
          %594 = vmatprep.subr.mxu0 0.0
          %595 = vmatpush1.msra.mxu0 0.0
          %596 = vmatprep.subr.mxu0 0.0
          %597 = vmatpush1.msra.mxu0 0.0
          %598 = vmatprep.subr.mxu0 0.0
          %599 = vmatpush1.msra.mxu0 0.0
          %600 = vmatprep.subr.mxu0 0.0
          %601 = vmatpush1.msra.mxu0 0.0
          %602 = vmatprep.subr.mxu0 0.0
          %603 = vmatpush1.msra.mxu0 0.0
          %604 = vmatprep.subr.mxu0 0.0
          %605 = vmatpush1.msra.mxu0 0.0
          %606 = vmatprep.subr.mxu0 0.0
          %607 = vmatpush1.msra.mxu0 0.0
          %608 = vmatprep.subr.mxu0 0.0
          %609 = vmatpush1.msra.mxu0 0.0
          %610 = vmatprep.subr.mxu0 0.0
          %611 = vmatpush1.msra.mxu0 0.0
          %612 = vmatprep.subr.mxu0 0.0
          %613 = vmatpush1.msra.mxu0 0.0
          %614 = vmatprep.subr.mxu0 0.0
          %615 = vmatpush1.msra.mxu0 0.0
          %616 = vmatprep.subr.mxu0 0.0
          %617 = vmatpush1.msra.mxu0 0.0
          %618 = vmatprep.subr.mxu0 0.0
          %619 = vmatpush1.msra.mxu0 0.0
          %620 = vmatprep.subr.mxu0 0.0
          %621 = vmatpush1.msra.mxu0 0.0
          %622 = vmatprep.subr.mxu0 0.0
          %623 = vmatpush1.msra.mxu0 0.0
          %624 = vmatprep.subr.mxu0 0.0
          %625 = vmatpush1.msra.mxu0 0.0
          %626 = vmatprep.mubr.f32.mxu0 0.0
          %627 = vmatmul.mubr.f32.gmra.mrb[0].mxu0 %v560
          %v628 = vpop.f32.mrb[0].mxu0
          %v629 = vadd.f32 0.0, %v628
          %v630 = vpop.f32.mrb[0].mxu0
          %631 = vdwg.mxu0
          %v634 = vcombine.high %v547, %v547
          %v636 = vunpack.c.l.s4 1966171168
          %v637 = vunpack.c.0.s8 %v636
          %v638 = vlaneseq
          %v639 = vshrl.u32 %v638, 7
          %v640 = vsub.s32 %v637, %v639
          %v641 = vrot.slane %v547, %v640
          %v643 = vunpack.c.l.s4 1966171168
          %v644 = vunpack.c.0.s8 %v643
          %v645 = vlaneseq
          %v646 = vshrl.u32 %v645, 7
          %v647 = vsub.s32 %v644, %v646
          %v648 = vrot.slane %v634, %v647
          %v649 = vcombine.high %v641, %v641
          %v650 = vcombine.high %v648, %v648
          %v652 = vunpack.c.l.s4 1966171168
          %v653 = vunpack.c.0.s8 %v652
          %v654 = vlaneseq
          %v655 = vshrl.u32 %v654, 7
          %v656 = vsub.s32 %v653, %v655
          %v657 = vrot.slane %v641, %v656
          %v659 = vunpack.c.l.s4 1966171168
          %v660 = vunpack.c.0.s8 %v659
          %v661 = vlaneseq
          %v662 = vshrl.u32 %v661, 7
          %v663 = vsub.s32 %v660, %v662
          %v664 = vrot.slane %v648, %v663
          %v666 = vunpack.c.l.s4 1966171168
          %v667 = vunpack.c.0.s8 %v666
          %v668 = vlaneseq
          %v669 = vshrl.u32 %v668, 7
          %v670 = vsub.s32 %v667, %v669
          %v671 = vrot.slane %v649, %v670
          %v673 = vunpack.c.l.s4 1966171168
          %v674 = vunpack.c.0.s8 %v673
          %v675 = vlaneseq
          %v676 = vshrl.u32 %v675, 7
          %v677 = vsub.s32 %v674, %v676
          %v678 = vrot.slane %v650, %v677
          %v679 = vcombine.high %v657, %v657
          %v680 = vcombine.high %v664, %v664
          %v681 = vcombine.high %v671, %v671
          %v682 = vcombine.high %v678, %v678
          %v683 = vcombine.high %v552, %v552
          %v685 = vunpack.c.l.s4 1966171168
          %v686 = vunpack.c.0.s8 %v685
          %v687 = vlaneseq
          %v688 = vshrl.u32 %v687, 7
          %v689 = vsub.s32 %v686, %v688
          %v690 = vrot.slane %v552, %v689
          %v692 = vunpack.c.l.s4 1966171168
          %v693 = vunpack.c.0.s8 %v692
          %v694 = vlaneseq
          %v695 = vshrl.u32 %v694, 7
          %v696 = vsub.s32 %v693, %v695
          %v697 = vrot.slane %v683, %v696
          %v698 = vcombine.high %v690, %v690
          %v699 = vcombine.high %v697, %v697
          %v701 = vunpack.c.l.s4 1966171168
          %v702 = vunpack.c.0.s8 %v701
          %v703 = vlaneseq
          %v704 = vshrl.u32 %v703, 7
          %v705 = vsub.s32 %v702, %v704
          %v706 = vrot.slane %v690, %v705
          %v708 = vunpack.c.l.s4 1966171168
          %v709 = vunpack.c.0.s8 %v708
          %v710 = vlaneseq
          %v711 = vshrl.u32 %v710, 7
          %v712 = vsub.s32 %v709, %v711
          %v713 = vrot.slane %v697, %v712
          %v715 = vunpack.c.l.s4 1966171168
          %v716 = vunpack.c.0.s8 %v715
          %v717 = vlaneseq
          %v718 = vshrl.u32 %v717, 7
          %v719 = vsub.s32 %v716, %v718
          %v720 = vrot.slane %v698, %v719
          %v722 = vunpack.c.l.s4 1966171168
          %v723 = vunpack.c.0.s8 %v722
          %v724 = vlaneseq
          %v725 = vshrl.u32 %v724, 7
          %v726 = vsub.s32 %v723, %v725
          %v727 = vrot.slane %v699, %v726
          %v728 = vcombine.high %v706, %v706
          %v729 = vcombine.high %v713, %v713
          %v730 = vcombine.high %v720, %v720
          %v731 = vcombine.high %v727, %v727
          %v732 = vlaneseq
          %v733 = vshrl.u32 %v732, 7
          %v734 = vsub.s32 0, %v733
          %v735 = vrot.slane %v657, %v734
          %v736 = vlaneseq
          %v737 = vshrl.u32 %v736, 7
          %v738 = vsub.s32 0, %v737
          %v739 = vrot.slane %v671, %v738
          %v740 = vlaneseq
          %v741 = vshrl.u32 %v740, 7
          %v742 = vsub.s32 0, %v741
          %v743 = vrot.slane %v679, %v742
          %v744 = vlaneseq
          %v745 = vshrl.u32 %v744, 7
          %v746 = vsub.s32 0, %v745
          %v747 = vrot.slane %v681, %v746
          %v748 = vlaneseq
          %v749 = vshrl.u32 %v748, 7
          %v750 = vsub.s32 0, %v749
          %v751 = vrot.slane %v664, %v750
          %v752 = vlaneseq
          %v753 = vshrl.u32 %v752, 7
          %v754 = vsub.s32 0, %v753
          %v755 = vrot.slane %v678, %v754
          %v756 = vlaneseq
          %v757 = vshrl.u32 %v756, 7
          %v758 = vsub.s32 0, %v757
          %v759 = vrot.slane %v680, %v758
          %v760 = vlaneseq
          %v761 = vshrl.u32 %v760, 7
          %v762 = vsub.s32 0, %v761
          %v763 = vrot.slane %v682, %v762
          %v764 = vlaneseq
          %v765 = vshrl.u32 %v764, 7
          %v766 = vsub.s32 0, %v765
          %v767 = vrot.slane %v706, %v766
          %v768 = vlaneseq
          %v769 = vshrl.u32 %v768, 7
          %v770 = vsub.s32 0, %v769
          %v771 = vrot.slane %v720, %v770
          %v772 = vlaneseq
          %v773 = vshrl.u32 %v772, 7
          %v774 = vsub.s32 0, %v773
          %v775 = vrot.slane %v728, %v774
          %v776 = vlaneseq
          %v777 = vshrl.u32 %v776, 7
          %v778 = vsub.s32 0, %v777
          %v779 = vrot.slane %v730, %v778
          %v780 = vlaneseq
          %v781 = vshrl.u32 %v780, 7
          %v782 = vsub.s32 0, %v781
          %v783 = vrot.slane %v713, %v782
          %v784 = vlaneseq
          %v785 = vshrl.u32 %v784, 7
          %v786 = vsub.s32 0, %v785
          %v787 = vrot.slane %v727, %v786
          %v788 = vlaneseq
          %v789 = vshrl.u32 %v788, 7
          %v790 = vsub.s32 0, %v789
          %v791 = vrot.slane %v729, %v790
          %v792 = vlaneseq
          %v793 = vshrl.u32 %v792, 7
          %v794 = vsub.s32 0, %v793
          %v795 = vrot.slane %v731, %v794
          %v812 = vadd.f32 %v735, %v629
          %v813 = vadd.f32 %v739, %v629
          %v814 = vadd.f32 %v743, %v629
          %v815 = vadd.f32 %v747, %v629
          %v816 = vadd.f32 %v751, %v629
          %v817 = vadd.f32 %v755, %v629
          %v818 = vadd.f32 %v759, %v629
          %v819 = vadd.f32 %v763, %v629
          %v820 = vadd.f32 %v767, %v629
          %v821 = vadd.f32 %v771, %v629
          %v822 = vadd.f32 %v775, %v629
          %v823 = vadd.f32 %v779, %v629
          %v824 = vadd.f32 %v783, %v629
          %v825 = vadd.f32 %v787, %v629
          %v826 = vadd.f32 %v791, %v629
          %v827 = vadd.f32 %v795, %v629
          %v828 = vtanh.pop %v812
          %v829 = vtanh.pop %v813
          %v830 = vtanh.pop %v814
          %v831 = vtanh.pop %v815
          %v832 = vtanh.pop %v816
          %v833 = vtanh.pop %v817
          %v834 = vtanh.pop %v818
          %v835 = vtanh.pop %v819
          %v836 = vtanh.pop %v820
          %v837 = vtanh.pop %v821
          %v838 = vtanh.pop %v822
          %v839 = vtanh.pop %v823
          %v840 = vtanh.pop %v824
          %v841 = vtanh.pop %v825
          %v842 = vtanh.pop %v826
          %v843 = vtanh.pop %v827
          %844 = vst [vmem:[#allocation2] sm:$0xff] %v828
          %845 = vst [vmem:[#allocation2 + $0x8] sm:$0xff] %v829
          %846 = vst [vmem:[#allocation2 + $0x10] sm:$0xff] %v830
          %847 = vst [vmem:[#allocation2 + $0x18] sm:$0xff] %v831
          %848 = vst [vmem:[#allocation2 + $0x20] sm:$0xff] %v832
          %849 = vst [vmem:[#allocation2 + $0x28] sm:$0xff] %v833
          %850 = vst [vmem:[#allocation2 + $0x30] sm:$0xff] %v834
          %851 = vst [vmem:[#allocation2 + $0x38] sm:$0xff] %v835
          %852 = vst [vmem:[#allocation2 + $0x40] sm:$0xff] %v836
          %853 = vst [vmem:[#allocation2 + $0x48] sm:$0xff] %v837
          %854 = vst [vmem:[#allocation2 + $0x50] sm:$0xff] %v838
          %855 = vst [vmem:[#allocation2 + $0x58] sm:$0xff] %v839
          %856 = vst [vmem:[#allocation2 + $0x60] sm:$0xff] %v840
          %857 = vst [vmem:[#allocation2 + $0x68] sm:$0xff] %v841
          %858 = vst [vmem:[#allocation2 + $0x70] sm:$0xff] %v842
          %859 = vst [vmem:[#allocation2 + $0x78] sm:$0xff] %v843
        $region72: #{tpu_custom_call.1} parent=47 // pred_fallthru
          _
        %v860 = vld [vmem:[#allocation2] sm:$0xff]
        %v861 = vld [vmem:[#allocation2 + $0x8] sm:$0xff]
        %v862 = vld [vmem:[#allocation2 + $0x10] sm:$0xff]
        %v863 = vld [vmem:[#allocation2 + $0x18] sm:$0xff]
        %v864 = vld [vmem:[#allocation2 + $0x20] sm:$0xff]
        %v865 = vld [vmem:[#allocation2 + $0x28] sm:$0xff]
        %v866 = vld [vmem:[#allocation2 + $0x30] sm:$0xff]
        %v867 = vld [vmem:[#allocation2 + $0x38] sm:$0xff]
        %v868 = vld [vmem:[#allocation2 + $0x40] sm:$0xff]
        %v869 = vld [vmem:[#allocation2 + $0x48] sm:$0xff]
        %v870 = vld [vmem:[#allocation2 + $0x50] sm:$0xff]
        %v871 = vld [vmem:[#allocation2 + $0x58] sm:$0xff]
        %v872 = vld [vmem:[#allocation2 + $0x60] sm:$0xff]
        %v873 = vld [vmem:[#allocation2 + $0x68] sm:$0xff]
        %v874 = vld [vmem:[#allocation2 + $0x70] sm:$0xff]
        %v875 = vld [vmem:[#allocation2 + $0x78] sm:$0xff]
        %v876 = vld [vmem:[%s406] sm:$0xff]
        %v877 = vld [vmem:[%s406 + $0x8] sm:$0xff]
        %v878 = vld [vmem:[%s406 + $0x10] sm:$0xff]
        %v879 = vld [vmem:[%s406 + $0x18] sm:$0xff]
        %v880 = vld [vmem:[%s406 + $0x20] sm:$0xff]
        %v881 = vld [vmem:[%s406 + $0x28] sm:$0xff]
        %v882 = vld [vmem:[%s406 + $0x30] sm:$0xff]
        %v883 = vld [vmem:[%s406 + $0x38] sm:$0xff]
        %v884 = vld [vmem:[%s406 + $0x40] sm:$0xff]
        %v885 = vld [vmem:[%s406 + $0x48] sm:$0xff]
        %v886 = vld [vmem:[%s406 + $0x50] sm:$0xff]
        %v887 = vld [vmem:[%s406 + $0x58] sm:$0xff]
        %v888 = vld [vmem:[%s406 + $0x60] sm:$0xff]
        %v889 = vld [vmem:[%s406 + $0x68] sm:$0xff]
        %v890 = vld [vmem:[%s406 + $0x70] sm:$0xff]
        %v891 = vld [vmem:[%s406 + $0x78] sm:$0xff]
        %v892 = vld [vmem:[%s453] sm:$0x1]
        %v894 = vlaneseq
        %v895 = vshrl.u32 %v894, 7
        %v896 = vsub.s32 0, %v895
        %v897 = vrot.slane %v892, %v896
        %899 = vmatprep.subr.mxu0 0.0
        %900 = vmatpush1.msra.mxu0 %v876
        %901 = vmatprep.subr.mxu0 0.0
        %902 = vmatpush1.msra.mxu0 %v877
        %903 = vmatprep.subr.mxu0 0.0
        %904 = vmatpush1.msra.mxu0 %v878
        %905 = vmatprep.subr.mxu0 0.0
        %906 = vmatpush1.msra.mxu0 %v879
        %907 = vmatprep.subr.mxu0 0.0
        %908 = vmatpush1.msra.mxu0 %v880
        %909 = vmatprep.subr.mxu0 0.0
        %910 = vmatpush1.msra.mxu0 %v881
        %911 = vmatprep.subr.mxu0 0.0
        %912 = vmatpush1.msra.mxu0 %v882
        %913 = vmatprep.subr.mxu0 0.0
        %914 = vmatpush1.msra.mxu0 %v883
        %915 = vmatprep.subr.mxu0 0.0
        %916 = vmatpush1.msra.mxu0 %v884
        %917 = vmatprep.subr.mxu0 0.0
        %918 = vmatpush1.msra.mxu0 %v885
        %919 = vmatprep.subr.mxu0 0.0
        %920 = vmatpush1.msra.mxu0 %v886
        %921 = vmatprep.subr.mxu0 0.0
        %922 = vmatpush1.msra.mxu0 %v887
        %923 = vmatprep.subr.mxu0 0.0
        %924 = vmatpush1.msra.mxu0 %v888
        %925 = vmatprep.subr.mxu0 0.0
        %926 = vmatpush1.msra.mxu0 %v889
        %927 = vmatprep.subr.mxu0 0.0
        %928 = vmatpush1.msra.mxu0 %v890
        %929 = vmatprep.subr.mxu0 0.0
        %930 = vmatpush1.msra.mxu0 %v891
        %931 = vmatprep.subr.mxu0 0.0
        %932 = vmatpush1.msra.mxu0 0.0
        %933 = vmatprep.subr.mxu0 0.0
        %934 = vmatpush1.msra.mxu0 0.0
        %935 = vmatprep.subr.mxu0 0.0
        %936 = vmatpush1.msra.mxu0 0.0
        %937 = vmatprep.subr.mxu0 0.0
        %938 = vmatpush1.msra.mxu0 0.0
        %939 = vmatprep.subr.mxu0 0.0
        %940 = vmatpush1.msra.mxu0 0.0
        %941 = vmatprep.subr.mxu0 0.0
        %942 = vmatpush1.msra.mxu0 0.0
        %943 = vmatprep.subr.mxu0 0.0
        %944 = vmatpush1.msra.mxu0 0.0
        %945 = vmatprep.subr.mxu0 0.0
        %946 = vmatpush1.msra.mxu0 0.0
        %947 = vmatprep.subr.mxu0 0.0
        %948 = vmatpush1.msra.mxu0 0.0
        %949 = vmatprep.subr.mxu0 0.0
        %950 = vmatpush1.msra.mxu0 0.0
        %951 = vmatprep.subr.mxu0 0.0
        %952 = vmatpush1.msra.mxu0 0.0
        %953 = vmatprep.subr.mxu0 0.0
        %954 = vmatpush1.msra.mxu0 0.0
        %955 = vmatprep.subr.mxu0 0.0
        %956 = vmatpush1.msra.mxu0 0.0
        %957 = vmatprep.subr.mxu0 0.0
        %958 = vmatpush1.msra.mxu0 0.0
        %959 = vmatprep.subr.mxu0 0.0
        %960 = vmatpush1.msra.mxu0 0.0
        %961 = vmatprep.subr.mxu0 0.0
        %962 = vmatpush1.msra.mxu0 0.0
        %963 = vmatprep.mubr.f32.mxu0 0.0
        %964 = vmatmul.mubr.f32.gmra.mrb[0].mxu0 %v860
        %v965 = vpop.f32.mrb[0].mxu0
        %v966 = vadd.f32 %v897, %v965
        %v967 = vpop.f32.mrb[0].mxu0
        %968 = vmatprep.mubr.f32.mxu0 0.0
        %969 = vmatmul.mubr.f32.gmra.mrb[0].mxu0 %v861
        %v970 = vpop.f32.mrb[0].mxu0
        %v971 = vadd.f32 %v897, %v970
        %v972 = vpop.f32.mrb[0].mxu0
        %973 = vmatprep.mubr.f32.mxu0 0.0
        %974 = vmatmul.mubr.f32.gmra.mrb[0].mxu0 %v862
        %v975 = vpop.f32.mrb[0].mxu0
        %v976 = vadd.f32 %v897, %v975
        %v977 = vpop.f32.mrb[0].mxu0
        %978 = vmatprep.mubr.f32.mxu0 0.0
        %979 = vmatmul.mubr.f32.gmra.mrb[0].mxu0 %v863
        %v980 = vpop.f32.mrb[0].mxu0
        %v981 = vadd.f32 %v897, %v980
        %v982 = vpop.f32.mrb[0].mxu0
        %983 = vmatprep.mubr.f32.mxu0 0.0
        %984 = vmatmul.mubr.f32.gmra.mrb[0].mxu0 %v864
        %v985 = vpop.f32.mrb[0].mxu0
        %v986 = vadd.f32 %v897, %v985
        %v987 = vpop.f32.mrb[0].mxu0
        %988 = vmatprep.mubr.f32.mxu0 0.0
        %989 = vmatmul.mubr.f32.gmra.mrb[0].mxu0 %v865
        %v990 = vpop.f32.mrb[0].mxu0
        %v991 = vadd.f32 %v897, %v990
        %v992 = vpop.f32.mrb[0].mxu0
        %993 = vmatprep.mubr.f32.mxu0 0.0
        %994 = vmatmul.mubr.f32.gmra.mrb[0].mxu0 %v866
        %v995 = vpop.f32.mrb[0].mxu0
        %v996 = vadd.f32 %v897, %v995
        %v997 = vpop.f32.mrb[0].mxu0
        %998 = vmatprep.mubr.f32.mxu0 0.0
        %999 = vmatmul.mubr.f32.gmra.mrb[0].mxu0 %v867
        %v1000 = vpop.f32.mrb[0].mxu0
        %v1001 = vadd.f32 %v897, %v1000
        %v1002 = vpop.f32.mrb[0].mxu0
        %1003 = vmatprep.mubr.f32.mxu0 0.0
        %1004 = vmatmul.mubr.f32.gmra.mrb[0].mxu0 %v868
        %v1005 = vpop.f32.mrb[0].mxu0
        %v1006 = vadd.f32 %v897, %v1005
        %v1007 = vpop.f32.mrb[0].mxu0
        %1008 = vmatprep.mubr.f32.mxu0 0.0
        %1009 = vmatmul.mubr.f32.gmra.mrb[0].mxu0 %v869
        %v1010 = vpop.f32.mrb[0].mxu0
        %v1011 = vadd.f32 %v897, %v1010
        %v1012 = vpop.f32.mrb[0].mxu0
        %1013 = vmatprep.mubr.f32.mxu0 0.0
        %1014 = vmatmul.mubr.f32.gmra.mrb[0].mxu0 %v870
        %v1015 = vpop.f32.mrb[0].mxu0
        %v1016 = vadd.f32 %v897, %v1015
        %v1017 = vpop.f32.mrb[0].mxu0
        %1018 = vmatprep.mubr.f32.mxu0 0.0
        %1019 = vmatmul.mubr.f32.gmra.mrb[0].mxu0 %v871
        %v1020 = vpop.f32.mrb[0].mxu0
        %v1021 = vadd.f32 %v897, %v1020
        %v1022 = vpop.f32.mrb[0].mxu0
        %1023 = vmatprep.mubr.f32.mxu0 0.0
        %1024 = vmatmul.mubr.f32.gmra.mrb[0].mxu0 %v872
        %v1025 = vpop.f32.mrb[0].mxu0
        %v1026 = vadd.f32 %v897, %v1025
        %v1027 = vpop.f32.mrb[0].mxu0
        %1028 = vmatprep.mubr.f32.mxu0 0.0
        %1029 = vmatmul.mubr.f32.gmra.mrb[0].mxu0 %v873
        %v1030 = vpop.f32.mrb[0].mxu0
        %v1031 = vadd.f32 %v897, %v1030
        %v1032 = vpop.f32.mrb[0].mxu0
        %1033 = vmatprep.mubr.f32.mxu0 0.0
        %1034 = vmatmul.mubr.f32.gmra.mrb[0].mxu0 %v874
        %v1035 = vpop.f32.mrb[0].mxu0
        %v1036 = vadd.f32 %v897, %v1035
        %v1037 = vpop.f32.mrb[0].mxu0
        %1038 = vmatprep.mubr.f32.mxu0 0.0
        %1039 = vmatmul.mubr.f32.gmra.mrb[0].mxu0 %v875
        %v1040 = vpop.f32.mrb[0].mxu0
        %v1041 = vadd.f32 %v897, %v1040
        %v1042 = vpop.f32.mrb[0].mxu0
        %1043 = vdwg.mxu0
        %1044 = vst [vmem:[%s449] sm:$0xff] %v966
        %1045 = vst [vmem:[%s449 + $0x8] sm:$0xff] %v971
        %1046 = vst [vmem:[%s449 + $0x10] sm:$0xff] %v976
        %1047 = vst [vmem:[%s449 + $0x18] sm:$0xff] %v981
        %1048 = vst [vmem:[%s449 + $0x20] sm:$0xff] %v986
        %1049 = vst [vmem:[%s449 + $0x28] sm:$0xff] %v991
        %1050 = vst [vmem:[%s449 + $0x30] sm:$0xff] %v996
        %1051 = vst [vmem:[%s449 + $0x38] sm:$0xff] %v1001
        %1052 = vst [vmem:[%s449 + $0x40] sm:$0xff] %v1006
        %1053 = vst [vmem:[%s449 + $0x48] sm:$0xff] %v1011
        %1054 = vst [vmem:[%s449 + $0x50] sm:$0xff] %v1016
        %1055 = vst [vmem:[%s449 + $0x58] sm:$0xff] %v1021
        %1056 = vst [vmem:[%s449 + $0x60] sm:$0xff] %v1026
        %1057 = vst [vmem:[%s449 + $0x68] sm:$0xff] %v1031
        %1058 = vst [vmem:[%s449 + $0x70] sm:$0xff] %v1036
        %1059 = vst [vmem:[%s449 + $0x78] sm:$0xff] %v1041
        %s1060 = sand.u32 %s239, 1
        %s1061 = scalar_lea.sflag [#allocation5], %s1060
        %s1062 = sand.u32 %s239, 1
        %s1063 = smul.addr %s1062, 128
        %s1064 = scalar_lea.vmem [#allocation12], %s1063
        // Predicated region
        $region73: #{tpu_custom_call.1} parent=47 // pred_check
          %p1065 = pneg %p249
        $region74: #{tpu_custom_call.1} parent=47 // pred_check_branch
          %1067 = sbr.rel (%p1065) target = $region76
        $region75: #{tpu_custom_call.1} parent=47 // pred_region
          %s1068 = smul.u32 16, %s35
          %s1070 = ssub.s32 2048, 2048
          %1071 = vsyncadd %s1061, %s1070
          %s1072 = smul.addr %s36, 2
          %s1073 = sadd.s32 %s37, %s1072
          %s1074 = smul.addr %s1068, 4
          %s1075 = sadd.s32 %s1073, %s1074
          %s1076 = smul.addr %s34, 128
          %s1077 = sadd.s32 %s1075, %s1076
          %s1078 = smul.addr %s1077, 128
          %s1079 = scalar_lea.hbm %s7, %s1078
          %s1080 = sshll.u32 %s1064, 4
          %s1081 = int_to_ptr.vmem [resolvable:$true] %s1080
          %1086 = dma.vmem_to_hbm [thread:$0]  %s1081, 2048, %s1079, %s1061, 128, 512, 8
        $region76: #{tpu_custom_call.1} parent=47 // pred_fallthru
          _
      $region48: #{tpu_custom_call.1} parent=5 // pred_fallthru
        _
      %p1087 = scmp.le.s32.totalorder 2, %s23
      // Predicated region
      $region77: #{tpu_custom_call.1} parent=5 // pred_check
        %p1088 = pneg %p1087
      $region78: #{tpu_custom_call.1} parent=5 // pred_check_branch
        %1090 = sbr.rel (%p1088) target = $region80
      $region79: #{tpu_custom_call.1} parent=5 // pred_region
        %s1091 = ssub.s32 %s23, 2
        // Predicated region
        $region81: #{tpu_custom_call.1} parent=79 // pred_check
          %p1092 = pneg %p255
        $region82: #{tpu_custom_call.1} parent=79 // pred_check_branch
          %1094 = sbr.rel (%p1092) target = $region84
        $region83: #{tpu_custom_call.1} parent=79 // pred_region
          %s1095 = sand.u32 %s240, 1
          %s1096 = scalar_lea.sflag [#allocation5], %s1095
          %s1097 = sand.u32 %s240, 1
          %s1098 = smul.addr %s1097, 128
          %s1099 = scalar_lea.vmem [#allocation12], %s1098
          %1100 = dma.done %s1096, 2048
        $region84: #{tpu_custom_call.1} parent=79 // pred_fallthru
          _
      $region80: #{tpu_custom_call.1} parent=5 // pred_fallthru
        _
    $region6: #{tpu_custom_call.1} parent=1 // loop_footer
      %s27 = sadd.s32 1, %s23
    $region7: #{tpu_custom_call.1} parent=1 // loop_footer_branch
      %22 = sbr.rel target = $region3
    $region8: #{tpu_custom_call.1} parent=1 // loop_exit
      _
    %1101 = vsyncpa [#allocation4], 1
    %s1102 = scalar_lea.sflag [#allocation4], 1
    %1103 = vsyncpa %s1102, 1
    %1104 = vsyncpa [#allocation7], 1
    %s1105 = scalar_lea.sflag [#allocation7], 1
    %1106 = vsyncpa %s1105, 1
    %1107 = vsyncpa [#allocation10], 1
    %1108 = vsyncpa [#allocation5], 1
    %s1109 = scalar_lea.sflag [#allocation5], 1
    %1110 = vsyncpa %s1109, 1

</llo_original>
